<compile_context>
chip_gen: v7x
topology: tpu7x:2x2x1
jax: 0.10.0
libtpu: 0.0.40
codegen_flags: <defaults>
</compile_context>

<pallas_src>
import functools

import jax
import jax.numpy as jnp
import numpy as np
from jax import lax
from jax.experimental import pallas as pl
from jax.experimental.pallas import tpu as pltpu


def _full_fast_stu_kernel(x_ref, mi_ref, w_ref, apow_ref, pbnd_ref, mbig_ref,
                          qmat_ref, out_ref, h_ref, xm_ref, z_ref,
                          *, sc, n_sub):
    # x_ref   : (TC, D)     bf16  raw inputs for this time chunk
    # mi_ref  : (D, DT)     bf16  M_inputs column tile
    # w_ref   : (S, DT)     f32   collapsed filter/readout weights W[s,d]
    # apow_ref: (S, 1)      f32   A^SC (per-state sub-chunk decay)
    # pbnd_ref: (SC, S)     f32   boundary operator   A[s]^(t+1)
    # mbig_ref: (SC, S*SC)  bf16  Toeplitz operator   A[s]^(t-j), j<=t
    # qmat_ref: (S, SC)     f32   carry operator      A[s]^(SC-1-j)
    # out_ref : (TC, DT)    bf16
    # h_ref   : (S, DT)     f32   scratch - LDS state carried across time chunks
    # xm_ref  : (TC, DT)    f32   scratch - x @ M_inputs for this chunk
    # z_ref   : (S*SC, DT)  bf16  scratch - W-weighted inputs (MXU RHS)
    S, DT = h_ref.shape

    # reset_state(): h0 = 0 at the first time-chunk of every (batch, D-tile)
    @pl.when(pl.program_id(2) == 0)
    def _():
        h_ref[...] = jnp.zeros_like(h_ref)

    # x @ M_inputs[:, d-tile]   (bf16 MXU, f32 accumulate)
    xm_ref[...] = jnp.dot(x_ref[...], mi_ref[...],
                          preferred_element_type=jnp.float32)

    w = w_ref[...]              # (S, DT) f32
    apow = apow_ref[...]        # (S, 1)  f32
    h = h_ref[...]              # (S, DT) f32  carried state

    for c in range(n_sub):      # static, n_sub in {1, 2}
        base = c * sc

        # Build Z[(s, j), d] = W[s, d] * xm[j, d] in bf16 (MXU RHS).
        # xm is re-read from VMEM per s to keep vreg live ranges small.
        for s in range(S):
            z_ref[pl.ds(s * sc, sc), :] = (
                xm_ref[pl.ds(base, sc), :] * w[s:s + 1, :]
            ).astype(z_ref.dtype)

        # Carried-state boundary term: bnd[t,d] = sum_s A^(t+1) W[s,d] h[s,d]
        bnd = jnp.dot(pbnd_ref[...], h * w,
                      preferred_element_type=jnp.float32)            # (SC, DT)

        # Intra-chunk term: one bf16 MXU matmul replaces SC serial VPU steps.
        intra = jnp.dot(mbig_ref[...], z_ref[...],
                        preferred_element_type=jnp.float32)          # (SC, DT)

        # One dense (SC, DT) slab store per sub-chunk (no masked row stores).
        out_ref[pl.ds(base, sc), :] = (bnd + intra).astype(out_ref.dtype)

        # Advance the carried state: h <- A^SC * h + Q @ xm_sub
        h = apow * h + jnp.dot(qmat_ref[...], xm_ref[pl.ds(base, sc), :],
                               preferred_element_type=jnp.float32)

    h_ref[...] = h


def _pick_time_chunk(T):
    for c in (256, 128, 64, 32, 16, 8):
        if T % c == 0:
            return c
    return T


def _pick_d_tile(D):
    for c in (512, 256, 128):
        if D % c == 0:
            return c
    return D


def _chunk_operators(A, sc):
    """Precompute the per-sub-chunk decay operators (plain JAX, runs once)."""
    S = A.shape[0]
    a = A.astype(jnp.float32)
    # pows[p, s] = A[s]^p for p = 0..sc  (cumprod: exact & safe for negative A)
    pows = jnp.concatenate(
        [jnp.ones((1, S), jnp.float32),
         jnp.cumprod(jnp.broadcast_to(a[None, :], (sc, S)), axis=0)], axis=0)
    pbnd = pows[1:sc + 1, :]                               # (SC, S):  A^(t+1)
    qmat = jnp.transpose(pows[sc - 1::-1, :])              # (S, SC):  A^(SC-1-j)
    apow = pows[sc, :].reshape(S, 1)                       # (S, 1):   A^SC
    t = jnp.arange(sc)
    diff = t[:, None] - t[None, :]                         # (SC, SC): t - j
    toe = jnp.where((diff >= 0)[:, :, None],
                    pows[jnp.clip(diff, 0, sc)], 0.0)      # (SC, SC, S)
    mbig = jnp.transpose(toe, (0, 2, 1)).reshape(sc, S * sc)
    return pbnd, mbig.astype(jnp.bfloat16), qmat, apow


def full_fast_stu_forward(x, M_inputs, M_filters, A, BC,
                          time_chunk=None, d_tile=None):
    """x: (B, T, D). M_inputs: (D, D). M_filters: (K, D). A: (S,). BC: (S, 2K)."""
    B, T, D = x.shape
    S = A.shape[0]
    K = M_filters.shape[0]
    assert BC.shape == (S, 2 * K)

    # Exact algebraic collapse of (BC -> M_filters -> diagonal extraction):
    #   W[s, d] = sum_k (BC[s, k] + BC[s, K+k]) * M_filters[k, d]
    bc_sum = (BC[:, :K] + BC[:, K:]).astype(jnp.float32)               # (S, K)
    W = jnp.dot(bc_sum, M_filters.astype(jnp.float32),
                preferred_element_type=jnp.float32)                    # (S, D)

    TC = time_chunk if time_chunk is not None else _pick_time_chunk(T)
    assert T % TC == 0
    SC = TC if TC <= 128 else 128         # cap the quadratic Toeplitz cost
    assert TC % SC == 0
    n_sub = TC // SC
    DT = d_tile if d_tile is not None else _pick_d_tile(D)
    assert D % DT == 0

    pbnd, mbig, qmat, apow = _chunk_operators(A, SC)

    # Explicit VMEM budget (streamed blocks double-buffered, constants counted
    # double-buffered too, plus scratch), with headroom.
    vmem = (2 * TC * D * 2            # x block (bf16)
            + 2 * D * DT * 2          # M_inputs block (bf16)
            + 2 * S * DT * 4          # W
            + 2 * S * 4               # A^SC
            + 2 * SC * S * 4          # P_bnd
            + 2 * SC * S * SC * 2     # M_big (bf16)
            + 2 * S * SC * 4          # Q
            + 2 * TC * DT * 2         # out block (bf16)
            + S * DT * 4              # h scratch
            + TC * DT * 4             # xm scratch
            + S * SC * DT * 2)        # Z scratch (bf16)
    vmem_limit = int(min(max(vmem * 3 // 2 + (4 << 20), 16 << 20), 64 << 20))

    kernel = functools.partial(_full_fast_stu_kernel, sc=SC, n_sub=n_sub)

    return pl.pallas_call(
        kernel,
        out_shape=jax.ShapeDtypeStruct((B, T, D), jnp.bfloat16),
        grid_spec=pltpu.PrefetchScalarGridSpec(
            num_scalar_prefetch=0,
            # time innermost ("arbitrary") so the carried h scratch stays
            # aligned with the @pl.when(t == 0) reset; B and D are parallel.
            grid=(B, D // DT, T // TC),
            in_specs=[
                pl.BlockSpec((None, TC, D), lambda b, d, t: (b, t, 0)),  # x
                pl.BlockSpec((D, DT),       lambda b, d, t: (0, d)),     # M_inputs
                pl.BlockSpec((S, DT),       lambda b, d, t: (0, d)),     # W
                pl.BlockSpec((S, 1),        lambda b, d, t: (0, 0)),     # A^SC
                pl.BlockSpec((SC, S),       lambda b, d, t: (0, 0)),     # P_bnd
                pl.BlockSpec((SC, S * SC),  lambda b, d, t: (0, 0)),     # M_big
                pl.BlockSpec((S, SC),       lambda b, d, t: (0, 0)),     # Q
            ],
            out_specs=pl.BlockSpec((None, TC, DT), lambda b, d, t: (b, t, d)),
            scratch_shapes=[
                pltpu.VMEM((S, DT), jnp.float32),        # h (carried over time)
                pltpu.VMEM((TC, DT), jnp.float32),       # x @ M_inputs
                pltpu.VMEM((S * SC, DT), jnp.bfloat16),  # Z (MXU RHS)
            ],
        ),
        compiler_params=pltpu.CompilerParams(
            dimension_semantics=("parallel", "parallel", "arbitrary"),
            vmem_limit_bytes=vmem_limit),
    )(x.astype(jnp.bfloat16), M_inputs.astype(jnp.bfloat16), W,
      apow, pbnd, mbig, qmat)


def reference_forward(x, M_inputs, M_filters, A, BC):
    """Pure-JAX transcription of FullFastSTU.forward (f32, use_hankel_L=False)."""
    x = x.astype(jnp.float32)
    xm = jnp.einsum('btd,de->bte', x, M_inputs)             # x @ M_inputs
    B, T, D = xm.shape
    S = A.shape[0]
    K = M_filters.shape[0]
    # permute(0,2,1).reshape(-1, T, 1) -> (B*D, T) scalar inputs per channel
    xr = jnp.transpose(xm, (0, 2, 1)).reshape(B * D, T)

    def step(h, xt):                                        # NLDS forward
        h = h * A + xt[:, None]
        return h, h @ BC

    h0 = jnp.zeros((B * D, S), jnp.float32)
    _, U = lax.scan(step, h0, jnp.transpose(xr, (1, 0)))    # (T, B*D, 2K)
    U = jnp.transpose(U, (1, 0, 2))                         # (B*D, T, 2K)

    U_plus = U[:, :, :K] @ M_filters                        # (B*D, T, D)
    U_minus = U[:, :, K:] @ M_filters
    U_combined = jnp.concatenate([U_plus, U_minus], axis=-1)
    Uf = jnp.transpose(U_combined.reshape(B, D, T, 2 * D), (0, 2, 3, 1))
    spd = jnp.diagonal(Uf[:, :, :D, :], axis1=2, axis2=3)
    smd = jnp.diagonal(Uf[:, :, D:, :], axis1=2, axis2=3)
    return (spd + smd).astype(jnp.bfloat16)


if __name__ == "__main__":
    # Small, module-consistent shapes: batch=2, seq=8, d_in=d_out=32,
    # LDS state_dim=16, K = num_eigh = half_size = 24 (2K = 48 LDS outputs).
    B, T, D, S, K = 2, 8, 32, 16, 24
    key = jax.random.PRNGKey(0)
    k1, k2, k3, k4, k5, k6 = jax.random.split(key, 6)

    x = jax.random.normal(k1, (B, T, D), jnp.float32)
    M_inputs = jax.random.normal(k2, (D, D), jnp.float32) / D
    M_filters = jax.random.normal(k3, (K, D), jnp.float32) / K
    # NLDS params (input_dim=1): A diag transition (tanh-squashed for stability),
    # B: (1, S), C: (S, 2K); setup() fuses BC = C * B.reshape(-1, 1).
    A = jnp.tanh(jax.random.normal(k4, (S,), jnp.float32))
    B_lds = jax.random.normal(k5, (1, S), jnp.float32)
    C_lds = jax.random.normal(k6, (S, 2 * K), jnp.float32) / S
    BC = C_lds * B_lds.reshape(-1, 1)

    out = full_fast_stu_forward(x, M_inputs, M_filters, A, BC)
    jax.block_until_ready(out)

    ref = reference_forward(x, M_inputs, M_filters, A, BC)
    assert out.shape == (B, T, D) and out.dtype == jnp.bfloat16
    np.testing.assert_allclose(np.asarray(out, np.float32),
                               np.asarray(ref, np.float32),
                               rtol=2e-2, atol=2e-2)
    print("KERNEL_OK")
</pallas_src>

<mosaic_0001>
module attributes {stable_mosaic.version = 11 : i64} {
  func.func @_full_fast_stu_kernel(%arg0: i32, %arg1: i32, %arg2: i32, %arg3: memref<1x8x32xbf16, #tpu.memory_space<vmem>>, %arg4: memref<32x32xbf16, #tpu.memory_space<vmem>>, %arg5: memref<16x32xf32, #tpu.memory_space<vmem>>, %arg6: memref<16x1xf32, #tpu.memory_space<vmem>>, %arg7: memref<8x16xf32, #tpu.memory_space<vmem>>, %arg8: memref<8x128xbf16, #tpu.memory_space<vmem>>, %arg9: memref<16x8xf32, #tpu.memory_space<vmem>>, %arg10: memref<1x8x32xbf16, #tpu.memory_space<vmem>>, %arg11: memref<16x32xf32, #tpu.memory_space<vmem>>, %arg12: memref<8x32xf32, #tpu.memory_space<vmem>>, %arg13: memref<128x32xbf16, #tpu.memory_space<vmem>>) attributes {dimension_semantics = [#tpu.dimension_semantics<parallel>, #tpu.dimension_semantics<parallel>, #tpu.dimension_semantics<arbitrary>], iteration_bounds = array<i64: 2, 1, 1>, scalar_prefetch = 0 : i64, scratch_operands = 3 : i64, tpu.core_type = #tpu.core_type<tc>, window_params = [{transform_indices = @transform_0, window_bounds = array<i64: 1, 8, 32>}, {transform_indices = @transform_1, window_bounds = array<i64: 32, 32>}, {transform_indices = @transform_2, window_bounds = array<i64: 16, 32>}, {pipeline_mode = #tpu.pipeline_mode<synchronous>, transform_indices = @transform_3, window_bounds = array<i64: 16, 1>}, {pipeline_mode = #tpu.pipeline_mode<synchronous>, transform_indices = @transform_4, window_bounds = array<i64: 8, 16>}, {pipeline_mode = #tpu.pipeline_mode<synchronous>, transform_indices = @transform_5, window_bounds = array<i64: 8, 128>}, {pipeline_mode = #tpu.pipeline_mode<synchronous>, transform_indices = @transform_6, window_bounds = array<i64: 16, 8>}, {transform_indices = @transform_7, window_bounds = array<i64: 1, 8, 32>}]} {
    %c0_i32 = arith.constant 0 : i32
    %0 = arith.cmpi eq, %arg2, %c0_i32 : i32
    %1 = arith.extui %0 : i1 to i32
    %c0_i32_0 = arith.constant 0 : i32
    %2 = arith.cmpi ne, %1, %c0_i32_0 : i32
    scf.if %2 {
      %cst_80 = arith.constant 0.000000e+00 : f32
      %125 = vector.broadcast %cst_80 : f32 to vector<16x32xf32>
      %c0_81 = arith.constant 0 : index
      %c0_82 = arith.constant 0 : index
      %126 = vector.load %arg11[%c0_81, %c0_82] : memref<16x32xf32, #tpu.memory_space<vmem>>, vector<16x32xf32>
      tpu.vector_store %arg11[%c0_81, %c0_82], %125 {strides = array<i32>} : memref<16x32xf32, #tpu.memory_space<vmem>>, vector<16x32xf32>,
    } else {
    }
    %c0 = arith.constant 0 : index
    %c0_1 = arith.constant 0 : index
    %c0_2 = arith.constant 0 : index
    %3 = vector.load %arg3[%c0, %c0_1, %c0_2] : memref<1x8x32xbf16, #tpu.memory_space<vmem>>, vector<1x8x32xbf16>
    %4 = vector.shape_cast %3 : vector<1x8x32xbf16> to vector<8x32xbf16>
    %c0_3 = arith.constant 0 : index
    %c0_4 = arith.constant 0 : index
    %5 = vector.load %arg4[%c0_3, %c0_4] : memref<32x32xbf16, #tpu.memory_space<vmem>>, vector<32x32xbf16>
    %cst = arith.constant dense<0.000000e+00> : vector<8x32xf32>
    %6 = tpu.matmul %4, %5, %cst {dimension_numbers = #tpu.dot_dimension_numbers<[1], [0], [0], [1], [0, 0, 1, 1], [], []>} : vector<8x32xbf16>, vector<32x32xbf16>, vector<8x32xf32> -> vector<8x32xf32>
    %c0_5 = arith.constant 0 : index
    %c0_6 = arith.constant 0 : index
    %7 = vector.load %arg12[%c0_5, %c0_6] : memref<8x32xf32, #tpu.memory_space<vmem>>, vector<8x32xf32>
    tpu.vector_store %arg12[%c0_5, %c0_6], %6 {strides = array<i32>} : memref<8x32xf32, #tpu.memory_space<vmem>>, vector<8x32xf32>,
    %c0_7 = arith.constant 0 : index
    %c0_8 = arith.constant 0 : index
    %8 = vector.load %arg5[%c0_7, %c0_8] : memref<16x32xf32, #tpu.memory_space<vmem>>, vector<16x32xf32>
    %c0_9 = arith.constant 0 : index
    %c0_10 = arith.constant 0 : index
    %9 = vector.load %arg6[%c0_9, %c0_10] : memref<16x1xf32, #tpu.memory_space<vmem>>, vector<16x1xf32>
    %c0_11 = arith.constant 0 : index
    %c0_12 = arith.constant 0 : index
    %10 = vector.load %arg11[%c0_11, %c0_12] : memref<16x32xf32, #tpu.memory_space<vmem>>, vector<16x32xf32>
    %c0_13 = arith.constant 0 : index
    %c0_14 = arith.constant 0 : index
    %11 = vector.load %arg12[%c0_13, %c0_14] : memref<8x32xf32, #tpu.memory_space<vmem>>, vector<8x32xf32>
    %12 = vector.extract_strided_slice %8 {offsets = [0, 0], sizes = [1, 32], strides = [1, 1]} : vector<16x32xf32> to vector<1x32xf32>
    %13 = vector.broadcast %12 : vector<1x32xf32> to vector<8x32xf32>
    %14 = arith.mulf %11, %13 : vector<8x32xf32>
    %15 = arith.truncf %14 : vector<8x32xf32> to vector<8x32xbf16>
    %c0_15 = arith.constant 0 : index
    %c0_16 = arith.constant 0 : index
    %16 = vector.load %arg13[%c0_15, %c0_16] : memref<128x32xbf16, #tpu.memory_space<vmem>>, vector<8x32xbf16>
    tpu.vector_store %arg13[%c0_15, %c0_16], %15 {strides = array<i32>} : memref<128x32xbf16, #tpu.memory_space<vmem>>, vector<8x32xbf16>,
    %c0_17 = arith.constant 0 : index
    %c0_18 = arith.constant 0 : index
    %17 = vector.load %arg12[%c0_17, %c0_18] : memref<8x32xf32, #tpu.memory_space<vmem>>, vector<8x32xf32>
    %18 = vector.extract_strided_slice %8 {offsets = [1, 0], sizes = [1, 32], strides = [1, 1]} : vector<16x32xf32> to vector<1x32xf32>
    %19 = vector.broadcast %18 : vector<1x32xf32> to vector<8x32xf32>
    %20 = arith.mulf %17, %19 : vector<8x32xf32>
    %21 = arith.truncf %20 : vector<8x32xf32> to vector<8x32xbf16>
    %c8 = arith.constant 8 : index
    %c0_19 = arith.constant 0 : index
    %22 = vector.load %arg13[%c8, %c0_19] : memref<128x32xbf16, #tpu.memory_space<vmem>>, vector<8x32xbf16>
    tpu.vector_store %arg13[%c8, %c0_19], %21 {strides = array<i32>} : memref<128x32xbf16, #tpu.memory_space<vmem>>, vector<8x32xbf16>,
    %c0_20 = arith.constant 0 : index
    %c0_21 = arith.constant 0 : index
    %23 = vector.load %arg12[%c0_20, %c0_21] : memref<8x32xf32, #tpu.memory_space<vmem>>, vector<8x32xf32>
    %24 = vector.extract_strided_slice %8 {offsets = [2, 0], sizes = [1, 32], strides = [1, 1]} : vector<16x32xf32> to vector<1x32xf32>
    %25 = vector.broadcast %24 : vector<1x32xf32> to vector<8x32xf32>
    %26 = arith.mulf %23, %25 : vector<8x32xf32>
    %27 = arith.truncf %26 : vector<8x32xf32> to vector<8x32xbf16>
    %c16 = arith.constant 16 : index
    %c0_22 = arith.constant 0 : index
    %28 = vector.load %arg13[%c16, %c0_22] : memref<128x32xbf16, #tpu.memory_space<vmem>>, vector<8x32xbf16>
    tpu.vector_store %arg13[%c16, %c0_22], %27 {strides = array<i32>} : memref<128x32xbf16, #tpu.memory_space<vmem>>, vector<8x32xbf16>,
    %c0_23 = arith.constant 0 : index
    %c0_24 = arith.constant 0 : index
    %29 = vector.load %arg12[%c0_23, %c0_24] : memref<8x32xf32, #tpu.memory_space<vmem>>, vector<8x32xf32>
    %30 = vector.extract_strided_slice %8 {offsets = [3, 0], sizes = [1, 32], strides = [1, 1]} : vector<16x32xf32> to vector<1x32xf32>
    %31 = vector.broadcast %30 : vector<1x32xf32> to vector<8x32xf32>
    %32 = arith.mulf %29, %31 : vector<8x32xf32>
    %33 = arith.truncf %32 : vector<8x32xf32> to vector<8x32xbf16>
    %c24 = arith.constant 24 : index
    %c0_25 = arith.constant 0 : index
    %34 = vector.load %arg13[%c24, %c0_25] : memref<128x32xbf16, #tpu.memory_space<vmem>>, vector<8x32xbf16>
    tpu.vector_store %arg13[%c24, %c0_25], %33 {strides = array<i32>} : memref<128x32xbf16, #tpu.memory_space<vmem>>, vector<8x32xbf16>,
    %c0_26 = arith.constant 0 : index
    %c0_27 = arith.constant 0 : index
    %35 = vector.load %arg12[%c0_26, %c0_27] : memref<8x32xf32, #tpu.memory_space<vmem>>, vector<8x32xf32>
    %36 = vector.extract_strided_slice %8 {offsets = [4, 0], sizes = [1, 32], strides = [1, 1]} : vector<16x32xf32> to vector<1x32xf32>
    %37 = vector.broadcast %36 : vector<1x32xf32> to vector<8x32xf32>
    %38 = arith.mulf %35, %37 : vector<8x32xf32>
    %39 = arith.truncf %38 : vector<8x32xf32> to vector<8x32xbf16>
    %c32 = arith.constant 32 : index
    %c0_28 = arith.constant 0 : index
    %40 = vector.load %arg13[%c32, %c0_28] : memref<128x32xbf16, #tpu.memory_space<vmem>>, vector<8x32xbf16>
    tpu.vector_store %arg13[%c32, %c0_28], %39 {strides = array<i32>} : memref<128x32xbf16, #tpu.memory_space<vmem>>, vector<8x32xbf16>,
    %c0_29 = arith.constant 0 : index
    %c0_30 = arith.constant 0 : index
    %41 = vector.load %arg12[%c0_29, %c0_30] : memref<8x32xf32, #tpu.memory_space<vmem>>, vector<8x32xf32>
    %42 = vector.extract_strided_slice %8 {offsets = [5, 0], sizes = [1, 32], strides = [1, 1]} : vector<16x32xf32> to vector<1x32xf32>
    %43 = vector.broadcast %42 : vector<1x32xf32> to vector<8x32xf32>
    %44 = arith.mulf %41, %43 : vector<8x32xf32>
    %45 = arith.truncf %44 : vector<8x32xf32> to vector<8x32xbf16>
    %c40 = arith.constant 40 : index
    %c0_31 = arith.constant 0 : index
    %46 = vector.load %arg13[%c40, %c0_31] : memref<128x32xbf16, #tpu.memory_space<vmem>>, vector<8x32xbf16>
    tpu.vector_store %arg13[%c40, %c0_31], %45 {strides = array<i32>} : memref<128x32xbf16, #tpu.memory_space<vmem>>, vector<8x32xbf16>,
    %c0_32 = arith.constant 0 : index
    %c0_33 = arith.constant 0 : index
    %47 = vector.load %arg12[%c0_32, %c0_33] : memref<8x32xf32, #tpu.memory_space<vmem>>, vector<8x32xf32>
    %48 = vector.extract_strided_slice %8 {offsets = [6, 0], sizes = [1, 32], strides = [1, 1]} : vector<16x32xf32> to vector<1x32xf32>
    %49 = vector.broadcast %48 : vector<1x32xf32> to vector<8x32xf32>
    %50 = arith.mulf %47, %49 : vector<8x32xf32>
    %51 = arith.truncf %50 : vector<8x32xf32> to vector<8x32xbf16>
    %c48 = arith.constant 48 : index
    %c0_34 = arith.constant 0 : index
    %52 = vector.load %arg13[%c48, %c0_34] : memref<128x32xbf16, #tpu.memory_space<vmem>>, vector<8x32xbf16>
    tpu.vector_store %arg13[%c48, %c0_34], %51 {strides = array<i32>} : memref<128x32xbf16, #tpu.memory_space<vmem>>, vector<8x32xbf16>,
    %c0_35 = arith.constant 0 : index
    %c0_36 = arith.constant 0 : index
    %53 = vector.load %arg12[%c0_35, %c0_36] : memref<8x32xf32, #tpu.memory_space<vmem>>, vector<8x32xf32>
    %54 = vector.extract_strided_slice %8 {offsets = [7, 0], sizes = [1, 32], strides = [1, 1]} : vector<16x32xf32> to vector<1x32xf32>
    %55 = vector.broadcast %54 : vector<1x32xf32> to vector<8x32xf32>
    %56 = arith.mulf %53, %55 : vector<8x32xf32>
    %57 = arith.truncf %56 : vector<8x32xf32> to vector<8x32xbf16>
    %c56 = arith.constant 56 : index
    %c0_37 = arith.constant 0 : index
    %58 = vector.load %arg13[%c56, %c0_37] : memref<128x32xbf16, #tpu.memory_space<vmem>>, vector<8x32xbf16>
    tpu.vector_store %arg13[%c56, %c0_37], %57 {strides = array<i32>} : memref<128x32xbf16, #tpu.memory_space<vmem>>, vector<8x32xbf16>,
    %c0_38 = arith.constant 0 : index
    %c0_39 = arith.constant 0 : index
    %59 = vector.load %arg12[%c0_38, %c0_39] : memref<8x32xf32, #tpu.memory_space<vmem>>, vector<8x32xf32>
    %60 = vector.extract_strided_slice %8 {offsets = [8, 0], sizes = [1, 32], strides = [1, 1]} : vector<16x32xf32> to vector<1x32xf32>
    %61 = vector.broadcast %60 : vector<1x32xf32> to vector<8x32xf32>
    %62 = arith.mulf %59, %61 : vector<8x32xf32>
    %63 = arith.truncf %62 : vector<8x32xf32> to vector<8x32xbf16>
    %c64 = arith.constant 64 : index
    %c0_40 = arith.constant 0 : index
    %64 = vector.load %arg13[%c64, %c0_40] : memref<128x32xbf16, #tpu.memory_space<vmem>>, vector<8x32xbf16>
    tpu.vector_store %arg13[%c64, %c0_40], %63 {strides = array<i32>} : memref<128x32xbf16, #tpu.memory_space<vmem>>, vector<8x32xbf16>,
    %c0_41 = arith.constant 0 : index
    %c0_42 = arith.constant 0 : index
    %65 = vector.load %arg12[%c0_41, %c0_42] : memref<8x32xf32, #tpu.memory_space<vmem>>, vector<8x32xf32>
    %66 = vector.extract_strided_slice %8 {offsets = [9, 0], sizes = [1, 32], strides = [1, 1]} : vector<16x32xf32> to vector<1x32xf32>
    %67 = vector.broadcast %66 : vector<1x32xf32> to vector<8x32xf32>
    %68 = arith.mulf %65, %67 : vector<8x32xf32>
    %69 = arith.truncf %68 : vector<8x32xf32> to vector<8x32xbf16>
    %c72 = arith.constant 72 : index
    %c0_43 = arith.constant 0 : index
    %70 = vector.load %arg13[%c72, %c0_43] : memref<128x32xbf16, #tpu.memory_space<vmem>>, vector<8x32xbf16>
    tpu.vector_store %arg13[%c72, %c0_43], %69 {strides = array<i32>} : memref<128x32xbf16, #tpu.memory_space<vmem>>, vector<8x32xbf16>,
    %c0_44 = arith.constant 0 : index
    %c0_45 = arith.constant 0 : index
    %71 = vector.load %arg12[%c0_44, %c0_45] : memref<8x32xf32, #tpu.memory_space<vmem>>, vector<8x32xf32>
    %72 = vector.extract_strided_slice %8 {offsets = [10, 0], sizes = [1, 32], strides = [1, 1]} : vector<16x32xf32> to vector<1x32xf32>
    %73 = vector.broadcast %72 : vector<1x32xf32> to vector<8x32xf32>
    %74 = arith.mulf %71, %73 : vector<8x32xf32>
    %75 = arith.truncf %74 : vector<8x32xf32> to vector<8x32xbf16>
    %c80 = arith.constant 80 : index
    %c0_46 = arith.constant 0 : index
    %76 = vector.load %arg13[%c80, %c0_46] : memref<128x32xbf16, #tpu.memory_space<vmem>>, vector<8x32xbf16>
    tpu.vector_store %arg13[%c80, %c0_46], %75 {strides = array<i32>} : memref<128x32xbf16, #tpu.memory_space<vmem>>, vector<8x32xbf16>,
    %c0_47 = arith.constant 0 : index
    %c0_48 = arith.constant 0 : index
    %77 = vector.load %arg12[%c0_47, %c0_48] : memref<8x32xf32, #tpu.memory_space<vmem>>, vector<8x32xf32>
    %78 = vector.extract_strided_slice %8 {offsets = [11, 0], sizes = [1, 32], strides = [1, 1]} : vector<16x32xf32> to vector<1x32xf32>
    %79 = vector.broadcast %78 : vector<1x32xf32> to vector<8x32xf32>
    %80 = arith.mulf %77, %79 : vector<8x32xf32>
    %81 = arith.truncf %80 : vector<8x32xf32> to vector<8x32xbf16>
    %c88 = arith.constant 88 : index
    %c0_49 = arith.constant 0 : index
    %82 = vector.load %arg13[%c88, %c0_49] : memref<128x32xbf16, #tpu.memory_space<vmem>>, vector<8x32xbf16>
    tpu.vector_store %arg13[%c88, %c0_49], %81 {strides = array<i32>} : memref<128x32xbf16, #tpu.memory_space<vmem>>, vector<8x32xbf16>,
    %c0_50 = arith.constant 0 : index
    %c0_51 = arith.constant 0 : index
    %83 = vector.load %arg12[%c0_50, %c0_51] : memref<8x32xf32, #tpu.memory_space<vmem>>, vector<8x32xf32>
    %84 = vector.extract_strided_slice %8 {offsets = [12, 0], sizes = [1, 32], strides = [1, 1]} : vector<16x32xf32> to vector<1x32xf32>
    %85 = vector.broadcast %84 : vector<1x32xf32> to vector<8x32xf32>
    %86 = arith.mulf %83, %85 : vector<8x32xf32>
    %87 = arith.truncf %86 : vector<8x32xf32> to vector<8x32xbf16>
    %c96 = arith.constant 96 : index
    %c0_52 = arith.constant 0 : index
    %88 = vector.load %arg13[%c96, %c0_52] : memref<128x32xbf16, #tpu.memory_space<vmem>>, vector<8x32xbf16>
    tpu.vector_store %arg13[%c96, %c0_52], %87 {strides = array<i32>} : memref<128x32xbf16, #tpu.memory_space<vmem>>, vector<8x32xbf16>,
    %c0_53 = arith.constant 0 : index
    %c0_54 = arith.constant 0 : index
    %89 = vector.load %arg12[%c0_53, %c0_54] : memref<8x32xf32, #tpu.memory_space<vmem>>, vector<8x32xf32>
    %90 = vector.extract_strided_slice %8 {offsets = [13, 0], sizes = [1, 32], strides = [1, 1]} : vector<16x32xf32> to vector<1x32xf32>
    %91 = vector.broadcast %90 : vector<1x32xf32> to vector<8x32xf32>
    %92 = arith.mulf %89, %91 : vector<8x32xf32>
    %93 = arith.truncf %92 : vector<8x32xf32> to vector<8x32xbf16>
    %c104 = arith.constant 104 : index
    %c0_55 = arith.constant 0 : index
    %94 = vector.load %arg13[%c104, %c0_55] : memref<128x32xbf16, #tpu.memory_space<vmem>>, vector<8x32xbf16>
    tpu.vector_store %arg13[%c104, %c0_55], %93 {strides = array<i32>} : memref<128x32xbf16, #tpu.memory_space<vmem>>, vector<8x32xbf16>,
    %c0_56 = arith.constant 0 : index
    %c0_57 = arith.constant 0 : index
    %95 = vector.load %arg12[%c0_56, %c0_57] : memref<8x32xf32, #tpu.memory_space<vmem>>, vector<8x32xf32>
    %96 = vector.extract_strided_slice %8 {offsets = [14, 0], sizes = [1, 32], strides = [1, 1]} : vector<16x32xf32> to vector<1x32xf32>
    %97 = vector.broadcast %96 : vector<1x32xf32> to vector<8x32xf32>
    %98 = arith.mulf %95, %97 : vector<8x32xf32>
    %99 = arith.truncf %98 : vector<8x32xf32> to vector<8x32xbf16>
    %c112 = arith.constant 112 : index
    %c0_58 = arith.constant 0 : index
    %100 = vector.load %arg13[%c112, %c0_58] : memref<128x32xbf16, #tpu.memory_space<vmem>>, vector<8x32xbf16>
    tpu.vector_store %arg13[%c112, %c0_58], %99 {strides = array<i32>} : memref<128x32xbf16, #tpu.memory_space<vmem>>, vector<8x32xbf16>,
    %c0_59 = arith.constant 0 : index
    %c0_60 = arith.constant 0 : index
    %101 = vector.load %arg12[%c0_59, %c0_60] : memref<8x32xf32, #tpu.memory_space<vmem>>, vector<8x32xf32>
    %102 = vector.extract_strided_slice %8 {offsets = [15, 0], sizes = [1, 32], strides = [1, 1]} : vector<16x32xf32> to vector<1x32xf32>
    %103 = vector.broadcast %102 : vector<1x32xf32> to vector<8x32xf32>
    %104 = arith.mulf %101, %103 : vector<8x32xf32>
    %105 = arith.truncf %104 : vector<8x32xf32> to vector<8x32xbf16>
    %c120 = arith.constant 120 : index
    %c0_61 = arith.constant 0 : index
    %106 = vector.load %arg13[%c120, %c0_61] : memref<128x32xbf16, #tpu.memory_space<vmem>>, vector<8x32xbf16>
    tpu.vector_store %arg13[%c120, %c0_61], %105 {strides = array<i32>} : memref<128x32xbf16, #tpu.memory_space<vmem>>, vector<8x32xbf16>,
    %c0_62 = arith.constant 0 : index
    %c0_63 = arith.constant 0 : index
    %107 = vector.load %arg7[%c0_62, %c0_63] : memref<8x16xf32, #tpu.memory_space<vmem>>, vector<8x16xf32>
    %108 = arith.mulf %10, %8 : vector<16x32xf32>
    %cst_64 = arith.constant dense<0.000000e+00> : vector<8x32xf32>
    %109 = tpu.matmul %107, %108, %cst_64 {dimension_numbers = #tpu.dot_dimension_numbers<[1], [0], [0], [1], [0, 0, 1, 1], [], []>} : vector<8x16xf32>, vector<16x32xf32>, vector<8x32xf32> -> vector<8x32xf32>
    %c0_65 = arith.constant 0 : index
    %c0_66 = arith.constant 0 : index
    %110 = vector.load %arg8[%c0_65, %c0_66] : memref<8x128xbf16, #tpu.memory_space<vmem>>, vector<8x128xbf16>
    %c0_67 = arith.constant 0 : index
    %c0_68 = arith.constant 0 : index
    %111 = vector.load %arg13[%c0_67, %c0_68] : memref<128x32xbf16, #tpu.memory_space<vmem>>, vector<128x32xbf16>
    %cst_69 = arith.constant dense<0.000000e+00> : vector<8x32xf32>
    %112 = tpu.matmul %110, %111, %cst_69 {dimension_numbers = #tpu.dot_dimension_numbers<[1], [0], [0], [1], [0, 0, 1, 1], [], []>} : vector<8x128xbf16>, vector<128x32xbf16>, vector<8x32xf32> -> vector<8x32xf32>
    %113 = arith.addf %109, %112 : vector<8x32xf32>
    %114 = arith.truncf %113 : vector<8x32xf32> to vector<8x32xbf16>
    %c0_70 = arith.constant 0 : index
    %c0_71 = arith.constant 0 : index
    %c0_72 = arith.constant 0 : index
    %115 = vector.load %arg10[%c0_70, %c0_71, %c0_72] : memref<1x8x32xbf16, #tpu.memory_space<vmem>>, vector<1x8x32xbf16>
    %116 = vector.shape_cast %115 : vector<1x8x32xbf16> to vector<8x32xbf16>
    %117 = vector.shape_cast %114 : vector<8x32xbf16> to vector<1x8x32xbf16>
    tpu.vector_store %arg10[%c0_70, %c0_71, %c0_72], %117 {strides = array<i32>} : memref<1x8x32xbf16, #tpu.memory_space<vmem>>, vector<1x8x32xbf16>,
    %118 = vector.broadcast %9 : vector<16x1xf32> to vector<16x32xf32>
    %119 = arith.mulf %118, %10 : vector<16x32xf32>
    %c0_73 = arith.constant 0 : index
    %c0_74 = arith.constant 0 : index
    %120 = vector.load %arg9[%c0_73, %c0_74] : memref<16x8xf32, #tpu.memory_space<vmem>>, vector<16x8xf32>
    %c0_75 = arith.constant 0 : index
    %c0_76 = arith.constant 0 : index
    %121 = vector.load %arg12[%c0_75, %c0_76] : memref<8x32xf32, #tpu.memory_space<vmem>>, vector<8x32xf32>
    %cst_77 = arith.constant dense<0.000000e+00> : vector<16x32xf32>
    %122 = tpu.matmul %120, %121, %cst_77 {dimension_numbers = #tpu.dot_dimension_numbers<[1], [0], [0], [1], [0, 0, 1, 1], [], []>} : vector<16x8xf32>, vector<8x32xf32>, vector<16x32xf32> -> vector<16x32xf32>
    %123 = arith.addf %119, %122 : vector<16x32xf32>
    %c0_78 = arith.constant 0 : index
    %c0_79 = arith.constant 0 : index
    %124 = vector.load %arg11[%c0_78, %c0_79] : memref<16x32xf32, #tpu.memory_space<vmem>>, vector<16x32xf32>
    tpu.vector_store %arg11[%c0_78, %c0_79], %123 {strides = array<i32>} : memref<16x32xf32, #tpu.memory_space<vmem>>, vector<16x32xf32>,
    return
  }
  func.func @transform_0(%arg0: i32, %arg1: i32, %arg2: i32) -> (i32, i32, i32) {
    %c0_i32 = arith.constant 0 : i32
    %c0_i32_0 = arith.constant 0 : i32
    return %arg0, %arg2, %c0_i32 : i32, i32, i32
  }
  func.func @transform_1(%arg0: i32, %arg1: i32, %arg2: i32) -> (i32, i32) {
    %c0_i32 = arith.constant 0 : i32
    %c0_i32_0 = arith.constant 0 : i32
    return %c0_i32, %arg1 : i32, i32
  }
  func.func @transform_2(%arg0: i32, %arg1: i32, %arg2: i32) -> (i32, i32) {
    %c0_i32 = arith.constant 0 : i32
    %c0_i32_0 = arith.constant 0 : i32
    return %c0_i32, %arg1 : i32, i32
  }
  func.func @transform_3(%arg0: i32, %arg1: i32, %arg2: i32) -> (i32, i32) {
    %c0_i32 = arith.constant 0 : i32
    %c0_i32_0 = arith.constant 0 : i32
    %c0_i32_1 = arith.constant 0 : i32
    return %c0_i32, %c0_i32_0 : i32, i32
  }
  func.func @transform_4(%arg0: i32, %arg1: i32, %arg2: i32) -> (i32, i32) {
    %c0_i32 = arith.constant 0 : i32
    %c0_i32_0 = arith.constant 0 : i32
    %c0_i32_1 = arith.constant 0 : i32
    return %c0_i32, %c0_i32_0 : i32, i32
  }
  func.func @transform_5(%arg0: i32, %arg1: i32, %arg2: i32) -> (i32, i32) {
    %c0_i32 = arith.constant 0 : i32
    %c0_i32_0 = arith.constant 0 : i32
    %c0_i32_1 = arith.constant 0 : i32
    return %c0_i32, %c0_i32_0 : i32, i32
  }
  func.func @transform_6(%arg0: i32, %arg1: i32, %arg2: i32) -> (i32, i32) {
    %c0_i32 = arith.constant 0 : i32
    %c0_i32_0 = arith.constant 0 : i32
    %c0_i32_1 = arith.constant 0 : i32
    return %c0_i32, %c0_i32_0 : i32, i32
  }
  func.func @transform_7(%arg0: i32, %arg1: i32, %arg2: i32) -> (i32, i32, i32) {
    %c0_i32 = arith.constant 0 : i32
    return %arg0, %arg2, %arg1 : i32, i32, i32
  }
}

</mosaic_0001>

<llo_original>
// kernel: tpu_custom_call.1
$region0: #{tpu_custom_call.1}
  #allocation0 [shape = 'u32[]', space=smem, size = 0x4, offset = 0x4, fixed_abs, tag = 'smem constant byte address 0x4 - core index']
  #allocation1 [shape = 'u32[144,128]{1,0:T(1,128)}', space=vmem, size = 0x12000, scoped, tag = 'internal scratch']
  #allocation2 [shape = 'f32[16,32]{1,0:T(8,128)}', space=vmem, size = 0x2000, scoped, tag = 'scratch operand']
  #allocation3 [shape = 'f32[8,32]{1,0:T(8,128)}', space=vmem, size = 0x1000, scoped, tag = 'scratch operand']
  #allocation4 [shape = 'bf16[128,32]{1,0:T(16,128)(2,1)}', space=vmem, size = 0x8000, scoped, tag = 'scratch operand']
  %s0 = inlined_call_operand.hbm [shape: bf16[2,8,32], index: 0, kind: input, shape index: {}]
  %s1 = inlined_call_operand.vmem [shape: bf16[32,32], index: 1, kind: input, shape index: {}]
  %s2 = inlined_call_operand.vmem [shape: f32[16,32], index: 2, kind: input, shape index: {}]
  %s3 = inlined_call_operand.vmem [shape: f32[16,1], index: 3, kind: input, shape index: {}]
  %s4 = inlined_call_operand.vmem [shape: f32[8,16], index: 4, kind: input, shape index: {}]
  %s5 = inlined_call_operand.vmem [shape: bf16[8,128], index: 5, kind: input, shape index: {}]
  %s6 = inlined_call_operand.vmem [shape: f32[16,8], index: 6, kind: input, shape index: {}]
  %s7 = inlined_call_operand.hbm [shape: bf16[2,8,32], index: 7, kind: output, shape index: {}]
  %s8 = sld [smem:[#allocation0]]
  $region69: #{tpu_custom_call.1} parent=0
    _
  %s10 = ssub.s32 1, %s8
  %s11 = scalar_select 0, %s10, %s8
  $region1: #{tpu_custom_call.1} parent=0
    #allocation5 [shape = 'u8[4096]{0}', space=vmem, size = 0x1000, scoped, tag = 'input window, operand 0']
    #allocation6 [shape = 's32[2]{0}', space=sflag, size = 0x8, scoped, tag = 'scoped memory for tpu_custom_call.1']
    #allocation7 [shape = 's32[2]{0}', space=sflag, size = 0x8, scoped, tag = 'scoped memory for tpu_custom_call.1']
    #allocation8 [shape = 'u8[4096]{0}', space=vmem, size = 0x1000, scoped, tag = 'output window, operand 0']
    %12 = vsyncpa [#allocation6], 0
    %s13 = scalar_lea.sflag [#allocation6], 1
    %14 = vsyncpa %s13, 0
    %15 = vsyncpa [#allocation7], 0
    %s16 = scalar_lea.sflag [#allocation7], 1
    %17 = vsyncpa %s16, 0
    loop: start=0, step=1, limit=4
    $region2: #{tpu_custom_call.1} parent=1 // loop_pre_header
      _
    $region3: #{tpu_custom_call.1} parent=1 // loop_header
      %s19 = sphi 0, %s23
      %p20 = scmp.ge.s32.totalorder %s19, 4
      %s26 = sphi 0, %s45
      %s27 = sphi 0, %s41
      %s28 = sphi 0, %s37
      %s29 = sphi 0, %s26
      %s30 = sphi 0, %s27
      %s31 = sphi 0, %s28
      %s32 = sphi 0, %s29
      %s33 = sphi 0, %s30
      %s34 = sphi 0, %s31
      %s50 = sphi 0, %s52
      %s53 = sphi 0, %s50
      %s54 = sphi 0, %s53
      %s70 = sphi 0, %s54
      %s76 = sphi 0, %s78
      %s79 = sphi 0, %s76
      %s80 = sphi 0, %s79
      %s96 = sphi 0, %s80
      %s102 = sphi 0, %s104
      %s105 = sphi 0, %s102
      %s106 = sphi 0, %s105
      %s122 = sphi 0, %s106
      %s126 = sphi 0, %s126
      %s128 = sphi 0, %s126
      %s129 = sphi 0, %s128
      %s143 = sphi 0, %s129
      %s147 = sphi 0, %s147
      %s149 = sphi 0, %s147
      %s150 = sphi 0, %s149
      %s164 = sphi 0, %s150
      %s168 = sphi 0, %s168
      %s170 = sphi 0, %s168
      %s171 = sphi 0, %s170
      %s185 = sphi 0, %s171
      %s189 = sphi 0, %s189
      %s191 = sphi 0, %s189
      %s192 = sphi 0, %s191
      %s206 = sphi 0, %s192
      %s216 = sphi 0, %s218
      %s219 = sphi 0, %s216
      %s220 = sphi 0, %s219
      %s236 = sphi 0, %s220
    $region4: #{tpu_custom_call.1} parent=1 // loop_header_branch
      %22 = sbr.rel (%p20) target = $region8
    $region5: #{tpu_custom_call.1} parent=1 // loop_body
      %s24 = ssub.s32 %s19, 1
      %s25 = ssub.s32 %s19, 2
      %s35 = sadd.s32 1, %s28
      %p36 = scmp.ge.s32.totalorder %s35, 1
      %s37 = scalar_select %p36, 0, %s35
      %s38 = sadd.s32 1, %s27
      %s39 = scalar_select %p36, %s38, %s27
      %p40 = scmp.ge.s32.totalorder %s39, 1
      %s41 = scalar_select %p40, 0, %s39
      %s42 = sadd.s32 1, %s26
      %s43 = scalar_select %p40, %s42, %s26
      %p44 = scmp.ge.s32.totalorder %s43, 2
      %s45 = scalar_select %p44, 0, %s43
      %s46 = ssub.s32 %s26, %s45
      %s47 = ssub.s32 %s28, %s37
      %s48 = sor.u32 %s46, %s47
      %p49 = scmp.eq.s32.totalorder %s48, 0
      %s51 = sadd.s32 %s50, 1
      %s52 = scalar_select %p49, %s50, %s51
      %p55 = pneg %p49
      %p56 = scmp.eq.s32.totalorder %s19, 1
      %p57 = por %p55, %p56
      %p58 = scmp.ne.s32.totalorder %s50, %s53
      %p59 = scmp.eq.s32.totalorder %s19, 0
      %p60 = por %p58, %p59
      %p61 = scmp.ne.s32.totalorder %s50, %s53
      %p62 = scmp.eq.s32.totalorder %s24, 1
      %p63 = por %p61, %p62
      %p64 = scmp.ne.s32.totalorder %s53, %s54
      %p65 = scmp.eq.s32.totalorder %s24, 0
      %p66 = por %p64, %p65
      %p67 = scmp.ne.s32.totalorder %s53, %s54
      %p68 = scmp.eq.s32.totalorder %s25, 1
      %p69 = por %p67, %p68
      %p71 = scmp.ne.s32.totalorder %s54, %s70
      %p72 = scmp.eq.s32.totalorder %s25, 0
      %p73 = por %p71, %p72
      %s74 = ssub.s32 %s27, %s41
      %p75 = scmp.eq.s32.totalorder %s74, 0
      %s77 = sadd.s32 %s76, 1
      %s78 = scalar_select %p75, %s76, %s77
      %p81 = pneg %p75
      %p82 = scmp.eq.s32.totalorder %s19, 1
      %p83 = por %p81, %p82
      %p84 = scmp.ne.s32.totalorder %s76, %s79
      %p85 = scmp.eq.s32.totalorder %s19, 0
      %p86 = por %p84, %p85
      %p87 = scmp.ne.s32.totalorder %s76, %s79
      %p88 = scmp.eq.s32.totalorder %s24, 1
      %p89 = por %p87, %p88
      %p90 = scmp.ne.s32.totalorder %s79, %s80
      %p91 = scmp.eq.s32.totalorder %s24, 0
      %p92 = por %p90, %p91
      %p93 = scmp.ne.s32.totalorder %s79, %s80
      %p94 = scmp.eq.s32.totalorder %s25, 1
      %p95 = por %p93, %p94
      %p97 = scmp.ne.s32.totalorder %s80, %s96
      %p98 = scmp.eq.s32.totalorder %s25, 0
      %p99 = por %p97, %p98
      %s100 = ssub.s32 %s27, %s41
      %p101 = scmp.eq.s32.totalorder %s100, 0
      %s103 = sadd.s32 %s102, 1
      %s104 = scalar_select %p101, %s102, %s103
      %p107 = pneg %p101
      %p108 = scmp.eq.s32.totalorder %s19, 1
      %p109 = por %p107, %p108
      %p110 = scmp.ne.s32.totalorder %s102, %s105
      %p111 = scmp.eq.s32.totalorder %s19, 0
      %p112 = por %p110, %p111
      %p113 = scmp.ne.s32.totalorder %s102, %s105
      %p114 = scmp.eq.s32.totalorder %s24, 1
      %p115 = por %p113, %p114
      %p116 = scmp.ne.s32.totalorder %s105, %s106
      %p117 = scmp.eq.s32.totalorder %s24, 0
      %p118 = por %p116, %p117
      %p119 = scmp.ne.s32.totalorder %s105, %s106
      %p120 = scmp.eq.s32.totalorder %s25, 1
      %p121 = por %p119, %p120
      %p123 = scmp.ne.s32.totalorder %s106, %s122
      %p124 = scmp.eq.s32.totalorder %s25, 0
      %p125 = por %p123, %p124
      %s127 = sadd.s32 %s126, 1
      %p130 = scmp.eq.s32.totalorder %s19, 1
      %p131 = scmp.ne.s32.totalorder %s126, %s128
      %p132 = scmp.eq.s32.totalorder %s19, 0
      %p133 = por %p131, %p132
      %p134 = scmp.ne.s32.totalorder %s126, %s128
      %p135 = scmp.eq.s32.totalorder %s24, 1
      %p136 = por %p134, %p135
      %p137 = scmp.ne.s32.totalorder %s128, %s129
      %p138 = scmp.eq.s32.totalorder %s24, 0
      %p139 = por %p137, %p138
      %p140 = scmp.ne.s32.totalorder %s128, %s129
      %p141 = scmp.eq.s32.totalorder %s25, 1
      %p142 = por %p140, %p141
      %p144 = scmp.ne.s32.totalorder %s129, %s143
      %p145 = scmp.eq.s32.totalorder %s25, 0
      %p146 = por %p144, %p145
      %s148 = sadd.s32 %s147, 1
      %p151 = scmp.eq.s32.totalorder %s19, 1
      %p152 = scmp.ne.s32.totalorder %s147, %s149
      %p153 = scmp.eq.s32.totalorder %s19, 0
      %p154 = por %p152, %p153
      %p155 = scmp.ne.s32.totalorder %s147, %s149
      %p156 = scmp.eq.s32.totalorder %s24, 1
      %p157 = por %p155, %p156
      %p158 = scmp.ne.s32.totalorder %s149, %s150
      %p159 = scmp.eq.s32.totalorder %s24, 0
      %p160 = por %p158, %p159
      %p161 = scmp.ne.s32.totalorder %s149, %s150
      %p162 = scmp.eq.s32.totalorder %s25, 1
      %p163 = por %p161, %p162
      %p165 = scmp.ne.s32.totalorder %s150, %s164
      %p166 = scmp.eq.s32.totalorder %s25, 0
      %p167 = por %p165, %p166
      %s169 = sadd.s32 %s168, 1
      %p172 = scmp.eq.s32.totalorder %s19, 1
      %p173 = scmp.ne.s32.totalorder %s168, %s170
      %p174 = scmp.eq.s32.totalorder %s19, 0
      %p175 = por %p173, %p174
      %p176 = scmp.ne.s32.totalorder %s168, %s170
      %p177 = scmp.eq.s32.totalorder %s24, 1
      %p178 = por %p176, %p177
      %p179 = scmp.ne.s32.totalorder %s170, %s171
      %p180 = scmp.eq.s32.totalorder %s24, 0
      %p181 = por %p179, %p180
      %p182 = scmp.ne.s32.totalorder %s170, %s171
      %p183 = scmp.eq.s32.totalorder %s25, 1
      %p184 = por %p182, %p183
      %p186 = scmp.ne.s32.totalorder %s171, %s185
      %p187 = scmp.eq.s32.totalorder %s25, 0
      %p188 = por %p186, %p187
      %s190 = sadd.s32 %s189, 1
      %p193 = scmp.eq.s32.totalorder %s19, 1
      %p194 = scmp.ne.s32.totalorder %s189, %s191
      %p195 = scmp.eq.s32.totalorder %s19, 0
      %p196 = por %p194, %p195
      %p197 = scmp.ne.s32.totalorder %s189, %s191
      %p198 = scmp.eq.s32.totalorder %s24, 1
      %p199 = por %p197, %p198
      %p200 = scmp.ne.s32.totalorder %s191, %s192
      %p201 = scmp.eq.s32.totalorder %s24, 0
      %p202 = por %p200, %p201
      %p203 = scmp.ne.s32.totalorder %s191, %s192
      %p204 = scmp.eq.s32.totalorder %s25, 1
      %p205 = por %p203, %p204
      %p207 = scmp.ne.s32.totalorder %s192, %s206
      %p208 = scmp.eq.s32.totalorder %s25, 0
      %p209 = por %p207, %p208
      %s210 = ssub.s32 %s26, %s45
      %s211 = ssub.s32 %s28, %s37
      %s212 = sor.u32 %s210, %s211
      %s213 = ssub.s32 %s27, %s41
      %s214 = sor.u32 %s212, %s213
      %p215 = scmp.eq.s32.totalorder %s214, 0
      %s217 = sadd.s32 %s216, 1
      %s218 = scalar_select %p215, %s216, %s217
      %p221 = pneg %p215
      %p222 = scmp.eq.s32.totalorder %s19, 1
      %p223 = por %p221, %p222
      %p224 = scmp.ne.s32.totalorder %s216, %s219
      %p225 = scmp.eq.s32.totalorder %s19, 0
      %p226 = por %p224, %p225
      %p227 = scmp.ne.s32.totalorder %s216, %s219
      %p228 = scmp.eq.s32.totalorder %s24, 1
      %p229 = por %p227, %p228
      %p230 = scmp.ne.s32.totalorder %s219, %s220
      %p231 = scmp.eq.s32.totalorder %s24, 0
      %p232 = por %p230, %p231
      %p233 = scmp.ne.s32.totalorder %s219, %s220
      %p234 = scmp.eq.s32.totalorder %s25, 1
      %p235 = por %p233, %p234
      %p237 = scmp.ne.s32.totalorder %s220, %s236
      %p238 = scmp.eq.s32.totalorder %s25, 0
      %p239 = por %p237, %p238
      %p240 = scmp.le.s32.totalorder 1, %s19
      %p241 = scmp.lt.s32.totalorder %s19, 3
      %p242 = pnand %p240, %p241
      %p243 = pneg %p242
      // Predicated region
      $region9: #{tpu_custom_call.1} parent=5 // pred_check
        _
      $region10: #{tpu_custom_call.1} parent=5 // pred_check_branch
        %245 = sbr.rel (%p242) target = $region12
      $region11: #{tpu_custom_call.1} parent=5 // pred_region
        %s246 = ssub.s32 %s19, 1
        // Predicated region
        $region13: #{tpu_custom_call.1} parent=11 // pred_check
          %p247 = pneg %p92
        $region14: #{tpu_custom_call.1} parent=11 // pred_check_branch
          %249 = sbr.rel (%p247) target = $region16
        $region15: #{tpu_custom_call.1} parent=11 // pred_region
          %p250 = scmp.lt.s32.totalorder %s30, 0
          %s251 = scalar_select %p250, %s30, 0
          %s252 = smul.addr %s251, 4
          %s253 = scalar_lea.vmem %s1, %s252
        $region16: #{tpu_custom_call.1} parent=11 // pred_fallthru
          _
        // Predicated region
        $region17: #{tpu_custom_call.1} parent=11 // pred_check
          %p254 = pneg %p118
        $region18: #{tpu_custom_call.1} parent=11 // pred_check_branch
          %256 = sbr.rel (%p254) target = $region20
        $region19: #{tpu_custom_call.1} parent=11 // pred_region
          %p257 = scmp.lt.s32.totalorder %s30, 0
          %s258 = scalar_select %p257, %s30, 0
          %s259 = smul.addr %s258, 8
          %s260 = scalar_lea.vmem %s2, %s259
        $region20: #{tpu_custom_call.1} parent=11 // pred_fallthru
          _
        // Predicated region
        $region21: #{tpu_custom_call.1} parent=11 // pred_check
          %p261 = pneg %p139
        $region22: #{tpu_custom_call.1} parent=11 // pred_check_branch
          %263 = sbr.rel (%p261) target = $region24
        $region23: #{tpu_custom_call.1} parent=11 // pred_region
          _
        $region24: #{tpu_custom_call.1} parent=11 // pred_fallthru
          _
        // Predicated region
        $region25: #{tpu_custom_call.1} parent=11 // pred_check
          %p264 = pneg %p160
        $region26: #{tpu_custom_call.1} parent=11 // pred_check_branch
          %266 = sbr.rel (%p264) target = $region28
        $region27: #{tpu_custom_call.1} parent=11 // pred_region
          _
        $region28: #{tpu_custom_call.1} parent=11 // pred_fallthru
          _
        // Predicated region
        $region29: #{tpu_custom_call.1} parent=11 // pred_check
          %p267 = pneg %p181
        $region30: #{tpu_custom_call.1} parent=11 // pred_check_branch
          %269 = sbr.rel (%p267) target = $region32
        $region31: #{tpu_custom_call.1} parent=11 // pred_region
          _
        $region32: #{tpu_custom_call.1} parent=11 // pred_fallthru
          _
        // Predicated region
        $region33: #{tpu_custom_call.1} parent=11 // pred_check
          %p270 = pneg %p202
        $region34: #{tpu_custom_call.1} parent=11 // pred_check_branch
          %272 = sbr.rel (%p270) target = $region36
        $region35: #{tpu_custom_call.1} parent=11 // pred_region
          _
        $region36: #{tpu_custom_call.1} parent=11 // pred_fallthru
          _
      $region12: #{tpu_custom_call.1} parent=5 // pred_fallthru
        _
      %p273 = scmp.lt.s32.totalorder %s19, 2
      // Predicated region
      $region37: #{tpu_custom_call.1} parent=5 // pred_check
        %p274 = pneg %p273
      $region38: #{tpu_custom_call.1} parent=5 // pred_check_branch
        %276 = sbr.rel (%p274) target = $region40
      $region39: #{tpu_custom_call.1} parent=5 // pred_region
        // Predicated region
        $region41: #{tpu_custom_call.1} parent=39 // pred_check
          %p277 = pneg %p60
        $region42: #{tpu_custom_call.1} parent=39 // pred_check_branch
          %279 = sbr.rel (%p277) target = $region44
        $region43: #{tpu_custom_call.1} parent=39 // pred_region
          %s280 = sand.u32 %s50, 1
          %s281 = scalar_lea.sflag [#allocation6], %s280
          %s282 = sand.u32 %s50, 1
          %s283 = smul.addr %s282, 4
          %s284 = scalar_lea.vmem [#allocation5], %s283
          %s286 = ssub.s32 64, 64
          %287 = vsyncadd %s281, %s286
          %s288 = sadd.s32 %s28, %s26
          %s289 = smul.addr %s288, 64
          %s290 = scalar_lea.hbm %s0, %s289
          %s292 = sshll.u32 %s284, 4
          %s293 = int_to_ptr.vmem [resolvable:$true] %s292
          %295 = dma.hbm_to_vmem [thread:$0]  %s290, 64, %s293, %s281
        $region44: #{tpu_custom_call.1} parent=39 // pred_fallthru
          _
      $region40: #{tpu_custom_call.1} parent=5 // pred_fallthru
        _
      %p296 = scmp.le.s32.totalorder 1, %s19
      %p297 = scmp.lt.s32.totalorder %s19, 3
      %p298 = pnand %p296, %p297
      %p299 = pneg %p298
      // Predicated region
      $region45: #{tpu_custom_call.1} parent=5 // pred_check
        _
      $region46: #{tpu_custom_call.1} parent=5 // pred_check_branch
        %301 = sbr.rel (%p298) target = $region48
      $region47: #{tpu_custom_call.1} parent=5 // pred_region
        %s302 = ssub.s32 %s19, 1
        %s303 = sand.u32 %s53, 1
        %s304 = scalar_lea.sflag [#allocation6], %s303
        %s305 = sand.u32 %s53, 1
        %s306 = smul.addr %s305, 4
        %s307 = scalar_lea.vmem [#allocation5], %s306
        // Predicated region
        $region49: #{tpu_custom_call.1} parent=47 // pred_check
          %p308 = pneg %p66
        $region50: #{tpu_custom_call.1} parent=47 // pred_check_branch
          %310 = sbr.rel (%p308) target = $region52
        $region51: #{tpu_custom_call.1} parent=47 // pred_region
          %311 = dma.done %s304, 64
        $region52: #{tpu_custom_call.1} parent=47 // pred_fallthru
          _
        %s312 = sand.u32 %s53, 1
        %s313 = scalar_lea.sflag [#allocation6], %s312
        %s314 = sand.u32 %s53, 1
        %s315 = smul.addr %s314, 4
        %s316 = scalar_lea.vmem [#allocation5], %s315
        %p317 = pneg %p66
        %p318 = pneg %p63
        %p319 = scmp.lt.s32.totalorder %s30, 0
        %s320 = scalar_select %p319, %s30, 0
        %s321 = smul.addr %s320, 4
        %s322 = scalar_lea.vmem %s1, %s321
        %p323 = pneg %p92
        %p324 = pneg %p89
        %p325 = scmp.lt.s32.totalorder %s30, 0
        %s326 = scalar_select %p325, %s30, 0
        %s327 = smul.addr %s326, 8
        %s328 = scalar_lea.vmem %s2, %s327
        %p329 = pneg %p118
        %p330 = pneg %p115
        %p331 = pneg %p139
        %p332 = pneg %p136
        %p333 = pneg %p160
        %p334 = pneg %p157
        %p335 = pneg %p181
        %p336 = pneg %p178
        %p337 = pneg %p202
        %p338 = pneg %p199
        %p339 = pneg %p232
        %p340 = pneg %p229
        %s341 = sand.u32 %s219, 1
        %s342 = scalar_lea.sflag [#allocation7], %s341
        %s343 = sand.u32 %s219, 1
        %s344 = smul.addr %s343, 4
        %s345 = scalar_lea.vmem [#allocation8], %s344
        %p346 = scmp.lt.s32.totalorder %s30, 0
        %s347 = scalar_select %p346, %s30, 0
        %s348 = smul.addr %s347, 4
        %s349 = scalar_lea.vmem %s1, %s348
        %p350 = scmp.lt.s32.totalorder %s30, 0
        %s351 = scalar_select %p350, %s30, 0
        %s352 = smul.addr %s351, 8
        %s353 = scalar_lea.vmem %s2, %s352
        %p355 = scmp.eq.s32.totalorder %s31, 0
        // Predicated region
        $region53: #{tpu_custom_call.1} parent=47 // pred_check
          %p356 = pneg %p355
        $region54: #{tpu_custom_call.1} parent=47 // pred_check_branch
          %358 = sbr.rel (%p356) target = $region56
        $region55: #{tpu_custom_call.1} parent=47 // pred_region
          %vm359 = vcmask 261120
          %360 = vst.msk [vmem:[#allocation2] sm:$0xff] %vm359, 0.0
          %361 = vst.msk [vmem:[#allocation2 + $0x8] sm:$0xff] %vm359, 0.0
        $region56: #{tpu_custom_call.1} parent=47 // pred_fallthru
          _
        %v362 = vld [vmem:[%s307] sm:$0xf]
        %v363 = vld [vmem:[%s349] sm:$0xf]
        %v364 = vld [vmem:[%s349 + $0x4] sm:$0xf]
        %v365 = vld [vmem:[%s349 + $0x8] sm:$0xf]
        %v366 = vld [vmem:[%s349 + $0xc] sm:$0xf]
        %v371 = vunpack.c.l.b16 %v363
        %v372 = vunpack.c.l.b16 %v364
        %v373 = vunpack.c.l.b16 %v365
        %v374 = vunpack.c.l.b16 %v366
        %v375 = vpack.c.b16 %v372, %v371
        %v376 = vpack.c.b16 %v374, %v373
        %vm379 = vcmask 261120
        %v381 = vsel %vm379, %v362, 0
        %383 = vmatprep.subr.bf16.mxu0 0
        %384 = vmatpush1.bf16.msra.mxu0 %v375
        %385 = vmatprep.subr.bf16.mxu0 0
        %386 = vmatpush1.bf16.msra.mxu0 %v376
        %387 = vmatprep.subr.bf16.mxu0 0
        %388 = vmatpush1.bf16.msra.mxu0 0
        %389 = vmatprep.subr.bf16.mxu0 0
        %390 = vmatpush1.bf16.msra.mxu0 0
        %391 = vmatprep.subr.bf16.mxu0 0
        %392 = vmatpush1.bf16.msra.mxu0 0
        %393 = vmatprep.subr.bf16.mxu0 0
        %394 = vmatpush1.bf16.msra.mxu0 0
        %395 = vmatprep.subr.bf16.mxu0 0
        %396 = vmatpush1.bf16.msra.mxu0 0
        %397 = vmatprep.subr.bf16.mxu0 0
        %398 = vmatpush1.bf16.msra.mxu0 0
        %399 = vmatprep.subr.bf16.mxu0 0
        %400 = vmatpush1.bf16.msra.mxu0 0
        %401 = vmatprep.subr.bf16.mxu0 0
        %402 = vmatpush1.bf16.msra.mxu0 0
        %403 = vmatprep.subr.bf16.mxu0 0
        %404 = vmatpush1.bf16.msra.mxu0 0
        %405 = vmatprep.subr.bf16.mxu0 0
        %406 = vmatpush1.bf16.msra.mxu0 0
        %407 = vmatprep.subr.bf16.mxu0 0
        %408 = vmatpush1.bf16.msra.mxu0 0
        %409 = vmatprep.subr.bf16.mxu0 0
        %410 = vmatpush1.bf16.msra.mxu0 0
        %411 = vmatprep.subr.bf16.mxu0 0
        %412 = vmatpush1.bf16.msra.mxu0 0
        %413 = vmatprep.subr.bf16.mxu0 0
        %414 = vmatpush1.bf16.msra.mxu0 0
        %415 = vmatprep.mubr.bf16.mxu0 0
        %416 = vmatmul.mubr.bf16.gmra.mrb[0].mxu0 %v381
        %v417 = vpop.f32.mrb[0].mxu0
        %v418 = vadd.f32 0.0, %v417
        %v419 = vpop.f32.mrb[0].mxu0
        %v420 = vpop.f32.mrb[0].mxu0
        %v421 = vpop.f32.mrb[0].mxu0
        %422 = vdwg.mxu0
        %423 = vst.msk [vmem:[#allocation3] sm:$0xff] %vm379, %v418
        %v424 = vld [vmem:[%s353] sm:$0xff]
        %v425 = vld [vmem:[%s353 + $0x8] sm:$0xff]
        %v426 = vld [vmem:[%s3] sm:$0xff]
        %v427 = vld [vmem:[%s3 + $0x8] sm:$0xff]
        %v428 = vld [vmem:[#allocation2] sm:$0xff]
        %v429 = vld [vmem:[#allocation2 + $0x8] sm:$0xff]
        %v430 = vld [vmem:[#allocation3] sm:$0xff]
        %v431 = vlaneseq
        %v432 = vshrl.u32 %v431, 7
        %v433 = vsub.s32 0, %v432
        %v434 = vrot.slane %v424, %v433
        %v435 = vmul.f32 %v430, %v434
        %v436 = vpack.c.bf16 %v435, %v435
        %vm437 = vcmask 257024
        %438 = vst.msk [vmem:[#allocation4] sm:$0xf] %vm437, %v436
        %v439 = vld [vmem:[#allocation3] sm:$0xff]
        %v440 = vlaneseq
        %v441 = vshrl.u32 %v440, 7
        %v442 = vsub.s32 1, %v441
        %v443 = vrot.slane %v424, %v442
        %v444 = vmul.f32 %v439, %v443
        %v445 = vpack.c.bf16 %v444, %v444
        %v447 = vrot.slane %v445, 4
        %vm449 = vcmask 261124
        %450 = vst.msk [vmem:[#allocation4] sm:$0xf0] %vm449, %v447
        %v451 = vld [vmem:[#allocation3] sm:$0xff]
        %v452 = vlaneseq
        %v453 = vshrl.u32 %v452, 7
        %v454 = vsub.s32 2, %v453
        %v455 = vrot.slane %v424, %v454
        %v456 = vmul.f32 %v451, %v455
        %v457 = vpack.c.bf16 %v456, %v456
        %458 = vst.msk [vmem:[#allocation4 + $0x8] sm:$0xf] %vm437, %v457
        %v459 = vld [vmem:[#allocation3] sm:$0xff]
        %v460 = vlaneseq
        %v461 = vshrl.u32 %v460, 7
        %v462 = vsub.s32 3, %v461
        %v463 = vrot.slane %v424, %v462
        %v464 = vmul.f32 %v459, %v463
        %v465 = vpack.c.bf16 %v464, %v464
        %v467 = vrot.slane %v465, 4
        %469 = vst.msk [vmem:[#allocation4 + $0x8] sm:$0xf0] %vm449, %v467
        %v470 = vld [vmem:[#allocation3] sm:$0xff]
        %v471 = vlaneseq
        %v472 = vshrl.u32 %v471, 7
        %v473 = vsub.s32 4, %v472
        %v474 = vrot.slane %v424, %v473
        %v475 = vmul.f32 %v470, %v474
        %v476 = vpack.c.bf16 %v475, %v475
        %477 = vst.msk [vmem:[#allocation4 + $0x10] sm:$0xf] %vm437, %v476
        %v478 = vld [vmem:[#allocation3] sm:$0xff]
        %v479 = vlaneseq
        %v480 = vshrl.u32 %v479, 7
        %v481 = vsub.s32 5, %v480
        %v482 = vrot.slane %v424, %v481
        %v483 = vmul.f32 %v478, %v482
        %v484 = vpack.c.bf16 %v483, %v483
        %v486 = vrot.slane %v484, 4
        %488 = vst.msk [vmem:[#allocation4 + $0x10] sm:$0xf0] %vm449, %v486
        %v489 = vld [vmem:[#allocation3] sm:$0xff]
        %v490 = vlaneseq
        %v491 = vshrl.u32 %v490, 7
        %v492 = vsub.s32 6, %v491
        %v493 = vrot.slane %v424, %v492
        %v494 = vmul.f32 %v489, %v493
        %v495 = vpack.c.bf16 %v494, %v494
        %496 = vst.msk [vmem:[#allocation4 + $0x18] sm:$0xf] %vm437, %v495
        %v497 = vld [vmem:[#allocation3] sm:$0xff]
        %v498 = vlaneseq
        %v499 = vshrl.u32 %v498, 7
        %v500 = vsub.s32 7, %v499
        %v501 = vrot.slane %v424, %v500
        %v502 = vmul.f32 %v497, %v501
        %v503 = vpack.c.bf16 %v502, %v502
        %v505 = vrot.slane %v503, 4
        %507 = vst.msk [vmem:[#allocation4 + $0x18] sm:$0xf0] %vm449, %v505
        %v508 = vld [vmem:[#allocation3] sm:$0xff]
        %v509 = vlaneseq
        %v510 = vshrl.u32 %v509, 7
        %v511 = vsub.s32 0, %v510
        %v512 = vrot.slane %v425, %v511
        %v513 = vmul.f32 %v508, %v512
        %v514 = vpack.c.bf16 %v513, %v513
        %515 = vst.msk [vmem:[#allocation4 + $0x20] sm:$0xf] %vm437, %v514
        %v516 = vld [vmem:[#allocation3] sm:$0xff]
        %v517 = vlaneseq
        %v518 = vshrl.u32 %v517, 7
        %v519 = vsub.s32 1, %v518
        %v520 = vrot.slane %v425, %v519
        %v521 = vmul.f32 %v516, %v520
        %v522 = vpack.c.bf16 %v521, %v521
        %v524 = vrot.slane %v522, 4
        %526 = vst.msk [vmem:[#allocation4 + $0x20] sm:$0xf0] %vm449, %v524
        %v527 = vld [vmem:[#allocation3] sm:$0xff]
        %v528 = vlaneseq
        %v529 = vshrl.u32 %v528, 7
        %v530 = vsub.s32 2, %v529
        %v531 = vrot.slane %v425, %v530
        %v532 = vmul.f32 %v527, %v531
        %v533 = vpack.c.bf16 %v532, %v532
        %534 = vst.msk [vmem:[#allocation4 + $0x28] sm:$0xf] %vm437, %v533
        %v535 = vld [vmem:[#allocation3] sm:$0xff]
        %v536 = vlaneseq
        %v537 = vshrl.u32 %v536, 7
        %v538 = vsub.s32 3, %v537
        %v539 = vrot.slane %v425, %v538
        %v540 = vmul.f32 %v535, %v539
        %v541 = vpack.c.bf16 %v540, %v540
        %v543 = vrot.slane %v541, 4
        %545 = vst.msk [vmem:[#allocation4 + $0x28] sm:$0xf0] %vm449, %v543
        %v546 = vld [vmem:[#allocation3] sm:$0xff]
        %v547 = vlaneseq
        %v548 = vshrl.u32 %v547, 7
        %v549 = vsub.s32 4, %v548
        %v550 = vrot.slane %v425, %v549
        %v551 = vmul.f32 %v546, %v550
        %v552 = vpack.c.bf16 %v551, %v551
        %553 = vst.msk [vmem:[#allocation4 + $0x30] sm:$0xf] %vm437, %v552
        %v554 = vld [vmem:[#allocation3] sm:$0xff]
        %v555 = vlaneseq
        %v556 = vshrl.u32 %v555, 7
        %v557 = vsub.s32 5, %v556
        %v558 = vrot.slane %v425, %v557
        %v559 = vmul.f32 %v554, %v558
        %v560 = vpack.c.bf16 %v559, %v559
        %v562 = vrot.slane %v560, 4
        %564 = vst.msk [vmem:[#allocation4 + $0x30] sm:$0xf0] %vm449, %v562
        %v565 = vld [vmem:[#allocation3] sm:$0xff]
        %v566 = vlaneseq
        %v567 = vshrl.u32 %v566, 7
        %v568 = vsub.s32 6, %v567
        %v569 = vrot.slane %v425, %v568
        %v570 = vmul.f32 %v565, %v569
        %v571 = vpack.c.bf16 %v570, %v570
        %572 = vst.msk [vmem:[#allocation4 + $0x38] sm:$0xf] %vm437, %v571
        %v573 = vld [vmem:[#allocation3] sm:$0xff]
        %v574 = vlaneseq
        %v575 = vshrl.u32 %v574, 7
        %v576 = vsub.s32 7, %v575
        %v577 = vrot.slane %v425, %v576
        %v578 = vmul.f32 %v573, %v577
        %v579 = vpack.c.bf16 %v578, %v578
        %v581 = vrot.slane %v579, 4
        %583 = vst.msk [vmem:[#allocation4 + $0x38] sm:$0xf0] %vm449, %v581
        %v584 = vld [vmem:[%s4] sm:$0xff]
        %v585 = vmul.f32 %v428, %v424
        %v586 = vmul.f32 %v429, %v425
        %v587 = vld [vmem:[%s5] sm:$0xf]
        %v588 = vld [vmem:[#allocation4] sm:$0xff]
        %v589 = vld [vmem:[#allocation4 + $0x8] sm:$0xff]
        %v590 = vld [vmem:[#allocation4 + $0x10] sm:$0xff]
        %v591 = vld [vmem:[#allocation4 + $0x18] sm:$0xff]
        %v592 = vld [vmem:[#allocation4 + $0x20] sm:$0xff]
        %v593 = vld [vmem:[#allocation4 + $0x28] sm:$0xff]
        %v594 = vld [vmem:[#allocation4 + $0x30] sm:$0xff]
        %v595 = vld [vmem:[#allocation4 + $0x38] sm:$0xff]
        %596 = vmatprep.subr.bf16.mxu0 0
        %597 = vmatpush1.bf16.msra.mxu0 %v588
        %598 = vmatprep.subr.bf16.mxu0 0
        %599 = vmatpush1.bf16.msra.mxu0 %v589
        %600 = vmatprep.subr.bf16.mxu0 0
        %601 = vmatpush1.bf16.msra.mxu0 %v590
        %602 = vmatprep.subr.bf16.mxu0 0
        %603 = vmatpush1.bf16.msra.mxu0 %v591
        %604 = vmatprep.subr.bf16.mxu0 0
        %605 = vmatpush1.bf16.msra.mxu0 %v592
        %606 = vmatprep.subr.bf16.mxu0 0
        %607 = vmatpush1.bf16.msra.mxu0 %v593
        %608 = vmatprep.subr.bf16.mxu0 0
        %609 = vmatpush1.bf16.msra.mxu0 %v594
        %610 = vmatprep.subr.bf16.mxu0 0
        %611 = vmatpush1.bf16.msra.mxu0 %v595
        %612 = vmatprep.subr.bf16.mxu0 0
        %613 = vmatpush1.bf16.msra.mxu0 0
        %614 = vmatprep.subr.bf16.mxu0 0
        %615 = vmatpush1.bf16.msra.mxu0 0
        %616 = vmatprep.subr.bf16.mxu0 0
        %617 = vmatpush1.bf16.msra.mxu0 0
        %618 = vmatprep.subr.bf16.mxu0 0
        %619 = vmatpush1.bf16.msra.mxu0 0
        %620 = vmatprep.subr.bf16.mxu0 0
        %621 = vmatpush1.bf16.msra.mxu0 0
        %622 = vmatprep.subr.bf16.mxu0 0
        %623 = vmatpush1.bf16.msra.mxu0 0
        %624 = vmatprep.subr.bf16.mxu0 0
        %625 = vmatpush1.bf16.msra.mxu0 0
        %626 = vmatprep.subr.bf16.mxu0 0
        %627 = vmatpush1.bf16.msra.mxu0 0
        %628 = vmatprep.mubr.bf16.mxu0 0
        %629 = vmatmul.mubr.bf16.gmra.mrb[0].mxu0 %v587
        %v630 = vpop.f32.mrb[0].mxu0
        %v631 = vadd.f32 0.0, %v630
        %v632 = vpop.f32.mrb[0].mxu0
        %v633 = vpop.f32.mrb[0].mxu0
        %v634 = vpop.f32.mrb[0].mxu0
        %635 = vdwg.mxu0
        %vm636 = vcmask 130048
        %v638 = vsel %vm636, %v584, 0
        %640 = vmatprep.subr.mxu0 0.0
        %641 = vmatpush1.msra.mxu0 %v585
        %642 = vmatprep.subr.mxu0 0.0
        %643 = vmatpush1.msra.mxu0 %v586
        %644 = vmatprep.subr.mxu0 0.0
        %645 = vmatpush1.msra.mxu0 0.0
        %646 = vmatprep.subr.mxu0 0.0
        %647 = vmatpush1.msra.mxu0 0.0
        %648 = vmatprep.subr.mxu0 0.0
        %649 = vmatpush1.msra.mxu0 0.0
        %650 = vmatprep.subr.mxu0 0.0
        %651 = vmatpush1.msra.mxu0 0.0
        %652 = vmatprep.subr.mxu0 0.0
        %653 = vmatpush1.msra.mxu0 0.0
        %654 = vmatprep.subr.mxu0 0.0
        %655 = vmatpush1.msra.mxu0 0.0
        %656 = vmatprep.subr.mxu0 0.0
        %657 = vmatpush1.msra.mxu0 0.0
        %658 = vmatprep.subr.mxu0 0.0
        %659 = vmatpush1.msra.mxu0 0.0
        %660 = vmatprep.subr.mxu0 0.0
        %661 = vmatpush1.msra.mxu0 0.0
        %662 = vmatprep.subr.mxu0 0.0
        %663 = vmatpush1.msra.mxu0 0.0
        %664 = vmatprep.subr.mxu0 0.0
        %665 = vmatpush1.msra.mxu0 0.0
        %666 = vmatprep.subr.mxu0 0.0
        %667 = vmatpush1.msra.mxu0 0.0
        %668 = vmatprep.subr.mxu0 0.0
        %669 = vmatpush1.msra.mxu0 0.0
        %670 = vmatprep.subr.mxu0 0.0
        %671 = vmatpush1.msra.mxu0 0.0
        %672 = vmatprep.subr.mxu0 0.0
        %673 = vmatpush1.msra.mxu0 0.0
        %674 = vmatprep.subr.mxu0 0.0
        %675 = vmatpush1.msra.mxu0 0.0
        %676 = vmatprep.subr.mxu0 0.0
        %677 = vmatpush1.msra.mxu0 0.0
        %678 = vmatprep.subr.mxu0 0.0
        %679 = vmatpush1.msra.mxu0 0.0
        %680 = vmatprep.subr.mxu0 0.0
        %681 = vmatpush1.msra.mxu0 0.0
        %682 = vmatprep.subr.mxu0 0.0
        %683 = vmatpush1.msra.mxu0 0.0
        %684 = vmatprep.subr.mxu0 0.0
        %685 = vmatpush1.msra.mxu0 0.0
        %686 = vmatprep.subr.mxu0 0.0
        %687 = vmatpush1.msra.mxu0 0.0
        %688 = vmatprep.subr.mxu0 0.0
        %689 = vmatpush1.msra.mxu0 0.0
        %690 = vmatprep.subr.mxu0 0.0
        %691 = vmatpush1.msra.mxu0 0.0
        %692 = vmatprep.subr.mxu0 0.0
        %693 = vmatpush1.msra.mxu0 0.0
        %694 = vmatprep.subr.mxu0 0.0
        %695 = vmatpush1.msra.mxu0 0.0
        %696 = vmatprep.subr.mxu0 0.0
        %697 = vmatpush1.msra.mxu0 0.0
        %698 = vmatprep.subr.mxu0 0.0
        %699 = vmatpush1.msra.mxu0 0.0
        %700 = vmatprep.subr.mxu0 0.0
        %701 = vmatpush1.msra.mxu0 0.0
        %702 = vmatprep.subr.mxu0 0.0
        %703 = vmatpush1.msra.mxu0 0.0
        %704 = vmatprep.mubr.f32.mxu0 0.0
        %705 = vmatmul.mubr.f32.gmra.mrb[0].mxu0 %v638
        %v706 = vpop.f32.mrb[0].mxu0
        %v707 = vadd.f32 %v631, %v706
        %v708 = vpop.f32.mrb[0].mxu0
        %709 = vdwg.mxu0
        %v710 = vpack.c.bf16 %v707, %v707
        %711 = vst.msk [vmem:[%s345] sm:$0xf] %vm437, %v710
        %713 = vset.pattern.permute.xlu0 0
        %714 = vperm.xlu0 %713, %v426
        %v715 = vpop.permute.xlu0 %714
        %718 = vset.pattern.permute.xlu0 0
        %719 = vperm.xlu0 %718, %v427
        %v720 = vpop.permute.xlu0 %719
        %v722 = vmul.f32 %v715, %v428
        %v723 = vmul.f32 %v720, %v429
        %v724 = vld [vmem:[%s6] sm:$0xff]
        %v725 = vld [vmem:[%s6 + $0x8] sm:$0xff]
        %v726 = vld [vmem:[#allocation3] sm:$0xff]
        %vm727 = vcmask 64512
        %v729 = vsel %vm727, %v724, 0
        %v732 = vsel %vm727, %v725, 0
        %734 = vmatprep.subr.mxu0 0.0
        %735 = vmatpush1.msra.mxu0 %v726
        %736 = vmatprep.subr.mxu0 0.0
        %737 = vmatpush1.msra.mxu0 0.0
        %738 = vmatprep.subr.mxu0 0.0
        %739 = vmatpush1.msra.mxu0 0.0
        %740 = vmatprep.subr.mxu0 0.0
        %741 = vmatpush1.msra.mxu0 0.0
        %742 = vmatprep.subr.mxu0 0.0
        %743 = vmatpush1.msra.mxu0 0.0
        %744 = vmatprep.subr.mxu0 0.0
        %745 = vmatpush1.msra.mxu0 0.0
        %746 = vmatprep.subr.mxu0 0.0
        %747 = vmatpush1.msra.mxu0 0.0
        %748 = vmatprep.subr.mxu0 0.0
        %749 = vmatpush1.msra.mxu0 0.0
        %750 = vmatprep.subr.mxu0 0.0
        %751 = vmatpush1.msra.mxu0 0.0
        %752 = vmatprep.subr.mxu0 0.0
        %753 = vmatpush1.msra.mxu0 0.0
        %754 = vmatprep.subr.mxu0 0.0
        %755 = vmatpush1.msra.mxu0 0.0
        %756 = vmatprep.subr.mxu0 0.0
        %757 = vmatpush1.msra.mxu0 0.0
        %758 = vmatprep.subr.mxu0 0.0
        %759 = vmatpush1.msra.mxu0 0.0
        %760 = vmatprep.subr.mxu0 0.0
        %761 = vmatpush1.msra.mxu0 0.0
        %762 = vmatprep.subr.mxu0 0.0
        %763 = vmatpush1.msra.mxu0 0.0
        %764 = vmatprep.subr.mxu0 0.0
        %765 = vmatpush1.msra.mxu0 0.0
        %766 = vmatprep.subr.mxu0 0.0
        %767 = vmatpush1.msra.mxu0 0.0
        %768 = vmatprep.subr.mxu0 0.0
        %769 = vmatpush1.msra.mxu0 0.0
        %770 = vmatprep.subr.mxu0 0.0
        %771 = vmatpush1.msra.mxu0 0.0
        %772 = vmatprep.subr.mxu0 0.0
        %773 = vmatpush1.msra.mxu0 0.0
        %774 = vmatprep.subr.mxu0 0.0
        %775 = vmatpush1.msra.mxu0 0.0
        %776 = vmatprep.subr.mxu0 0.0
        %777 = vmatpush1.msra.mxu0 0.0
        %778 = vmatprep.subr.mxu0 0.0
        %779 = vmatpush1.msra.mxu0 0.0
        %780 = vmatprep.subr.mxu0 0.0
        %781 = vmatpush1.msra.mxu0 0.0
        %782 = vmatprep.subr.mxu0 0.0
        %783 = vmatpush1.msra.mxu0 0.0
        %784 = vmatprep.subr.mxu0 0.0
        %785 = vmatpush1.msra.mxu0 0.0
        %786 = vmatprep.subr.mxu0 0.0
        %787 = vmatpush1.msra.mxu0 0.0
        %788 = vmatprep.subr.mxu0 0.0
        %789 = vmatpush1.msra.mxu0 0.0
        %790 = vmatprep.subr.mxu0 0.0
        %791 = vmatpush1.msra.mxu0 0.0
        %792 = vmatprep.subr.mxu0 0.0
        %793 = vmatpush1.msra.mxu0 0.0
        %794 = vmatprep.subr.mxu0 0.0
        %795 = vmatpush1.msra.mxu0 0.0
        %796 = vmatprep.subr.mxu0 0.0
        %797 = vmatpush1.msra.mxu0 0.0
        %798 = vmatprep.mubr.f32.mxu0 0.0
        %799 = vmatmul.mubr.f32.gmra.mrb[0].mxu0 %v729
        %v800 = vpop.f32.mrb[0].mxu0
        %v801 = vadd.f32 0.0, %v800
        %v802 = vpop.f32.mrb[0].mxu0
        %803 = vmatprep.mubr.f32.mxu0 0.0
        %804 = vmatmul.mubr.f32.gmra.mrb[0].mxu0 %v732
        %v805 = vpop.f32.mrb[0].mxu0
        %v806 = vadd.f32 0.0, %v805
        %v807 = vpop.f32.mrb[0].mxu0
        %808 = vdwg.mxu0
        %v809 = vadd.f32 %v722, %v801
        %v810 = vadd.f32 %v723, %v806
        %811 = vst.msk [vmem:[#allocation2] sm:$0xff] %vm379, %v809
        %812 = vst.msk [vmem:[#allocation2 + $0x8] sm:$0xff] %vm379, %v810
        %s813 = sand.u32 %s219, 1
        %s814 = scalar_lea.sflag [#allocation7], %s813
        %s815 = sand.u32 %s219, 1
        %s816 = smul.addr %s815, 4
        %s817 = scalar_lea.vmem [#allocation8], %s816
        // Predicated region
        $region57: #{tpu_custom_call.1} parent=47 // pred_check
          %p818 = pneg %p229
        $region58: #{tpu_custom_call.1} parent=47 // pred_check_branch
          %820 = sbr.rel (%p818) target = $region60
        $region59: #{tpu_custom_call.1} parent=47 // pred_region
          %s822 = ssub.s32 64, 64
          %823 = vsyncadd %s814, %s822
          %s824 = sadd.s32 %s30, %s31
          %s825 = sadd.s32 %s824, %s29
          %s826 = smul.addr %s825, 64
          %s827 = scalar_lea.hbm %s7, %s826
          %s829 = sshll.u32 %s817, 4
          %s830 = int_to_ptr.vmem [resolvable:$true] %s829
          %832 = dma.vmem_to_hbm [thread:$0]  %s830, 64, %s827, %s814
        $region60: #{tpu_custom_call.1} parent=47 // pred_fallthru
          _
      $region48: #{tpu_custom_call.1} parent=5 // pred_fallthru
        _
      %p833 = scmp.le.s32.totalorder 2, %s19
      // Predicated region
      $region61: #{tpu_custom_call.1} parent=5 // pred_check
        %p834 = pneg %p833
      $region62: #{tpu_custom_call.1} parent=5 // pred_check_branch
        %836 = sbr.rel (%p834) target = $region64
      $region63: #{tpu_custom_call.1} parent=5 // pred_region
        %s837 = ssub.s32 %s19, 2
        // Predicated region
        $region65: #{tpu_custom_call.1} parent=63 // pred_check
          %p838 = pneg %p235
        $region66: #{tpu_custom_call.1} parent=63 // pred_check_branch
          %840 = sbr.rel (%p838) target = $region68
        $region67: #{tpu_custom_call.1} parent=63 // pred_region
          %s841 = sand.u32 %s220, 1
          %s842 = scalar_lea.sflag [#allocation7], %s841
          %s843 = sand.u32 %s220, 1
          %s844 = smul.addr %s843, 4
          %s845 = scalar_lea.vmem [#allocation8], %s844
          %846 = dma.done %s842, 64
        $region68: #{tpu_custom_call.1} parent=63 // pred_fallthru
          _
      $region64: #{tpu_custom_call.1} parent=5 // pred_fallthru
        _
    $region6: #{tpu_custom_call.1} parent=1 // loop_footer
      %s23 = sadd.s32 1, %s19
    $region7: #{tpu_custom_call.1} parent=1 // loop_footer_branch
      %18 = sbr.rel target = $region3
    $region8: #{tpu_custom_call.1} parent=1 // loop_exit
      _
    %847 = vsyncpa [#allocation6], 1
    %s848 = scalar_lea.sflag [#allocation6], 1
    %849 = vsyncpa %s848, 1
    %850 = vsyncpa [#allocation7], 1
    %s851 = scalar_lea.sflag [#allocation7], 1
    %852 = vsyncpa %s851, 1

</llo_original>
